<compile_context>
chip_gen: v5e
topology: v5e:2x2
jax: 0.10.0
libtpu: 0.0.40
codegen_flags: <defaults>
</compile_context>

<pallas_src>
import math

import jax
import jax.numpy as jnp
import numpy as np
from jax.experimental import pallas as pl
from jax.experimental.pallas import tpu as pltpu

_LANE = 128
_SUBLANE = 8
_BLOCK_BYTES = 1 << 20          # ~1 MiB per block per operand (x2 operands, x2 buffers ≈ 4 MiB VMEM)
_VMEM_LIMIT = 32 * 1024 * 1024  # safe on v5e/v6e (128 MiB phys) and v7x (64 MiB phys)


def _pick_tile(dim, target, align):
    """Largest legal block size for `dim`: full dim if it fits under `target`,
    else a multiple of `align` <= target (preferring one that divides `dim`)."""
    if dim <= target:
        return dim
    target = max(align, (target // align) * align)
    t = target
    while t >= align:
        if dim % t == 0:
            return t
        t -= align
    return target  # non-dividing: Pallas masks the edge blocks


# ---------------------------------------------------------------------------
# Kernel 1: doubling + transpose of the last two axes of a (A, M, N) view.
# Blocks: in (ta, tm, tn) -> out (ta, tn, tm); index_maps swap the (i, j) blocks,
# the in-kernel 2-D .T does the lane<->sublane move (XLU).
# ---------------------------------------------------------------------------
def _double_swap_minor_kernel(x_ref, o_ref):
    def body(b, carry):
        t = x_ref[b] + x_ref[b]          # (tm, tn) VPU elementwise
        o_ref[b] = t.T                   # (tn, tm) minor transpose
        return carry
    jax.lax.fori_loop(0, x_ref.shape[0], body, 0)


def _transpose_last2(x3):
    """(A, M, N) -> (A, N, M) holding 2*x3; block permutation via BlockSpecs."""
    A, M, N = x3.shape
    dsize = x3.dtype.itemsize
    tm = _pick_tile(M, 512, _LANE)       # output lane dim: 128-mult or full
    tn = _pick_tile(N, 512, _LANE)       # input  lane dim: 128-mult or full
    ta = 1
    if tm == M and tn == N:
        # whole (M, N) slab fits one block: fold batch to amortize grid-step overhead
        ta = min(A, 256, max(1, _BLOCK_BYTES // max(1, M * N * dsize)))
        while ta > 1 and A % ta:
            ta -= 1                      # prefer a divisor of A (no masked edge blocks)
    grid = (pl.cdiv(A, ta), pl.cdiv(M, tm), pl.cdiv(N, tn))
    return pl.pallas_call(
        _double_swap_minor_kernel,
        out_shape=jax.ShapeDtypeStruct((A, N, M), x3.dtype),
        grid_spec=pltpu.PrefetchScalarGridSpec(
            num_scalar_prefetch=0,
            grid=grid,
            in_specs=[pl.BlockSpec((ta, tm, tn), lambda a, i, j: (a, i, j))],
            out_specs=pl.BlockSpec((ta, tn, tm), lambda a, i, j: (a, j, i)),
        ),
        compiler_params=pltpu.CompilerParams(
            dimension_semantics=("parallel", "parallel", "parallel"),
            vmem_limit_bytes=_VMEM_LIMIT),
    )(x3)


# ---------------------------------------------------------------------------
# Kernel 2: doubling + swap of two non-minor axes of a (A, M, B, N, C) view,
# producing (A, N, B, M, C).  The lane dim C is untouched, so the in-kernel work
# is only 2-D slab copies; A and B are squeezed grid dims.
# ---------------------------------------------------------------------------
def _double_swap_outer_kernel(x_ref, o_ref):
    # x_ref: (tm, tn, tc), o_ref: (tn, tm, tc); tn <= 8 -> small static unroll.
    tn = x_ref.shape[1]
    for n in range(tn):
        v = x_ref[:, n, :]               # (tm, tc) 2-D load
        o_ref[n, :, :] = v + v           # (tm, tc) 2-D store


def _transpose_outer(x5):
    """(A, M, B, N, C) -> (A, N, B, M, C) holding 2*x5; permutation in BlockSpecs."""
    A, M, B, N, C = x5.shape
    dsize = x5.dtype.itemsize
    tc = _pick_tile(C, 2048, _LANE)                      # lane dim: 128-mult or full
    tn = N if N <= _SUBLANE else _SUBLANE                # input sublane dim: 8 or full
    cap_m = max(_SUBLANE, _BLOCK_BYTES // max(1, tn * tc * dsize))
    tm = _pick_tile(M, cap_m, _SUBLANE)                  # output sublane dim: 8-mult or full
    grid = (A * B, pl.cdiv(M, tm), pl.cdiv(N, tn), pl.cdiv(C, tc))
    in_spec = pl.BlockSpec(
        (None, tm, None, tn, tc),
        lambda ab, i, j, k: (ab // B, i, ab % B, j, k))
    out_spec = pl.BlockSpec(
        (None, tn, None, tm, tc),
        lambda ab, i, j, k: (ab // B, j, ab % B, i, k))
    return pl.pallas_call(
        _double_swap_outer_kernel,
        out_shape=jax.ShapeDtypeStruct((A, N, B, M, C), x5.dtype),
        grid_spec=pltpu.PrefetchScalarGridSpec(
            num_scalar_prefetch=0,
            grid=grid,
            in_specs=[in_spec],
            out_specs=out_spec,
        ),
        compiler_params=pltpu.CompilerParams(
            dimension_semantics=("parallel", "parallel", "parallel", "parallel"),
            vmem_limit_bytes=_VMEM_LIMIT),
    )(x5)


# ---------------------------------------------------------------------------
# Kernel 3: pure doubling on a lane-dense 2-D view (degenerate / helper path).
# ---------------------------------------------------------------------------
def _double_kernel(x_ref, o_ref):
    o_ref[...] = x_ref[...] + x_ref[...]


def _double2d(x2):
    R, C = x2.shape
    dsize = x2.dtype.itemsize
    tc = _pick_tile(C, 4096, _LANE)
    cap_r = max(_SUBLANE, _BLOCK_BYTES // max(1, tc * dsize))
    tr = _pick_tile(R, cap_r, _SUBLANE)
    grid = (pl.cdiv(R, tr), pl.cdiv(C, tc))
    return pl.pallas_call(
        _double_kernel,
        out_shape=jax.ShapeDtypeStruct((R, C), x2.dtype),
        grid_spec=pltpu.PrefetchScalarGridSpec(
            num_scalar_prefetch=0,
            grid=grid,
            in_specs=[pl.BlockSpec((tr, tc), lambda i, j: (i, j))],
            out_specs=pl.BlockSpec((tr, tc), lambda i, j: (i, j)),
        ),
        compiler_params=pltpu.CompilerParams(
            dimension_semantics=("parallel", "parallel"),
            vmem_limit_bytes=_VMEM_LIMIT),
    )(x2)


def _double(x):
    """2*x via a lane-dense flattened 2-D view (shape-only reshapes)."""
    n = x.size
    c = next((cand for cand in (4096, 2048, 1024, 512, 256, 128) if n % cand == 0), None)
    if c is not None:
        x2 = x.reshape(n // c, c)
    elif x.ndim >= 2:
        x2 = x.reshape(-1, x.shape[-1])
    else:
        x2 = x.reshape(1, -1)
    return _double2d(x2).reshape(x.shape)


# ---------------------------------------------------------------------------
# Wrapper: SimpleTransposeModel.forward
# ---------------------------------------------------------------------------
def simple_transpose_model(x, dim0=None, dim1=None):
    """Pallas equivalent of SimpleTransposeModel(dim0, dim1)(x).
    (in-place vs out-of-place torch variants are semantically identical here.)"""
    nd = x.ndim
    if dim0 is not None and dim1 is not None:      # superset of the torch ctor's truthy check
        d0, d1 = dim0 % nd, dim1 % nd
    else:
        # torch .t(): <=2-D only; for <2-D it is the identity permutation.
        if nd > 2:
            raise ValueError("t() expects a tensor with <= 2 dimensions")
        if nd < 2:
            return _double(x)
        d0, d1 = 0, 1

    if d0 == d1:
        return _double(x)                          # transpose(d, d) is a no-op
    d0, d1 = (d0, d1) if d0 < d1 else (d1, d0)

    shape = x.shape
    A = math.prod(shape[:d0])
    M = shape[d0]
    B = math.prod(shape[d0 + 1:d1])
    N = shape[d1]
    C = math.prod(shape[d1 + 1:])
    out_shape = list(shape)
    out_shape[d0], out_shape[d1] = shape[d1], shape[d0]
    out_shape = tuple(out_shape)

    if C > 1:
        # Swapped axes do not touch the last axis: permutation lives in the index_maps.
        o5 = _transpose_outer(x.reshape(A, M, B, N, C))
        return o5.reshape(out_shape)
    if B == 1:
        # Swap of the last axis with the adjacent axis (incl. 2-D .t()).
        o3 = _transpose_last2(x.reshape(A, M, N))
        return o3.reshape(out_shape)

    # TODO(synk): non-adjacent swap that involves the last axis needs an in-kernel
    # lane<->major transpose; keep the arithmetic in Pallas and let XLA permute.
    return jnp.swapaxes(_double(x), d0, d1)


if __name__ == "__main__":
    key = jax.random.PRNGKey(0)
    k1, k2 = jax.random.split(key)

    # 1) default model: dims=None -> .t() on a 2-D tensor (last-2 transpose kernel)
    x2 = jax.random.normal(k1, (64, 128), dtype=jnp.float32)
    y = jax.block_until_ready(simple_transpose_model(x2))
    ref = jnp.transpose(x2 + x2)
    assert y.shape == ref.shape
    np.testing.assert_allclose(np.asarray(y), np.asarray(ref), rtol=1e-6, atol=1e-6)

    x4 = jax.random.normal(k2, (2, 4, 16, 16), dtype=jnp.float32)

    # 2) dims=(1, 2): swapped axes sit before the last axis -> BlockSpec-permuted path
    y = jax.block_until_ready(simple_transpose_model(x4, dim0=1, dim1=2))
    ref = jnp.swapaxes(x4 + x4, 1, 2)
    assert y.shape == ref.shape
    np.testing.assert_allclose(np.asarray(y), np.asarray(ref), rtol=1e-6, atol=1e-6)

    # 3) dims=(2, 3): adjacent swap of the last two axes -> batched in-tile transpose
    y = jax.block_until_ready(simple_transpose_model(x4, dim0=2, dim1=3))
    ref = jnp.swapaxes(x4 + x4, 2, 3)
    assert y.shape == ref.shape
    np.testing.assert_allclose(np.asarray(y), np.asarray(ref), rtol=1e-6, atol=1e-6)

    # 4) dims=(1, 3): non-adjacent swap involving the last axis -> Pallas doubling + XLA permute
    y = jax.block_until_ready(simple_transpose_model(x4, dim0=1, dim1=3))
    ref = jnp.swapaxes(x4 + x4, 1, 3)
    assert y.shape == ref.shape
    np.testing.assert_allclose(np.asarray(y), np.asarray(ref), rtol=1e-6, atol=1e-6)

    print("KERNEL_OK")
</pallas_src>

<mosaic_0001>
module attributes {stable_mosaic.version = 11 : i64} {
  func.func @_double_swap_minor_kernel(%arg0: i32, %arg1: i32, %arg2: i32, %arg3: memref<1x64x128xf32, #tpu.memory_space<vmem>>, %arg4: memref<1x128x64xf32, #tpu.memory_space<vmem>>) attributes {dimension_semantics = [#tpu.dimension_semantics<parallel>, #tpu.dimension_semantics<parallel>, #tpu.dimension_semantics<parallel>], iteration_bounds = array<i64: 1, 1, 1>, scalar_prefetch = 0 : i64, scratch_operands = 0 : i64, tpu.core_type = #tpu.core_type<tc>, window_params = [{transform_indices = @transform_0, window_bounds = array<i64: 1, 64, 128>}, {transform_indices = @transform_1, window_bounds = array<i64: 1, 128, 64>}]} {
    %c0_i32 = arith.constant 0 : i32
    %0 = arith.index_cast %c0_i32 : i32 to index
    %c0 = arith.constant 0 : index
    %c0_0 = arith.constant 0 : index
    %1 = vector.load %arg3[%0, %c0, %c0_0] : memref<1x64x128xf32, #tpu.memory_space<vmem>>, vector<1x64x128xf32>
    %2 = vector.shape_cast %1 : vector<1x64x128xf32> to vector<64x128xf32>
    %3 = arith.index_cast %c0_i32 : i32 to index
    %c0_1 = arith.constant 0 : index
    %c0_2 = arith.constant 0 : index
    %4 = vector.load %arg3[%3, %c0_1, %c0_2] : memref<1x64x128xf32, #tpu.memory_space<vmem>>, vector<1x64x128xf32>
    %5 = vector.shape_cast %4 : vector<1x64x128xf32> to vector<64x128xf32>
    %6 = arith.addf %2, %5 : vector<64x128xf32>
    %7 = tpu.transpose %6, [1, 0] : vector<64x128xf32> -> vector<128x64xf32>
    %8 = arith.index_cast %c0_i32 : i32 to index
    %c0_3 = arith.constant 0 : index
    %c0_4 = arith.constant 0 : index
    %9 = vector.load %arg4[%8, %c0_3, %c0_4] : memref<1x128x64xf32, #tpu.memory_space<vmem>>, vector<1x128x64xf32>
    %10 = vector.shape_cast %9 : vector<1x128x64xf32> to vector<128x64xf32>
    %11 = vector.shape_cast %7 : vector<128x64xf32> to vector<1x128x64xf32>
    tpu.vector_store %arg4[%8, %c0_3, %c0_4], %11 {strides = array<i32>} : memref<1x128x64xf32, #tpu.memory_space<vmem>>, vector<1x128x64xf32>,
    %c1_i32 = arith.constant 1 : i32
    return
  }
  func.func @transform_0(%arg0: i32, %arg1: i32, %arg2: i32) -> (i32, i32, i32) {
    %c0_i32 = arith.constant 0 : i32
    return %arg0, %arg1, %arg2 : i32, i32, i32
  }
  func.func @transform_1(%arg0: i32, %arg1: i32, %arg2: i32) -> (i32, i32, i32) {
    %c0_i32 = arith.constant 0 : i32
    return %arg0, %arg2, %arg1 : i32, i32, i32
  }
}

</mosaic_0001>

<llo_original>
// kernel: tpu_custom_call.1
$region0: #{tpu_custom_call.1}
  #allocation0 [shape = 'u32[]', space=smem, size = 0x4, offset = 0x4, fixed_abs, tag = 'smem constant byte address 0x4 - core index']
  #allocation1 [shape = 'u32[72,128]{1,0:T(1,128)}', space=vmem, size = 0x9000, scoped, tag = 'internal scratch']
  %s0 = inlined_call_operand.hbm [shape: f32[1,64,128], index: 0, kind: input, shape index: {}]
  %s1 = inlined_call_operand.vmem [shape: f32[1,128,64], index: 1, kind: output, shape index: {}]
  %s2 = sld [smem:[#allocation0]]
  $region18: #{tpu_custom_call.1} parent=0
    _
  %s4 = ssub.s32 1, %s2
  %s5 = scalar_select 0, %s4, %s2
  $region1: #{tpu_custom_call.1} parent=0
    #allocation2 [shape = 'u8[32768]{0}', space=vmem, size = 0x8000, scoped, tag = 'input window, operand 0, single buffered']
    #allocation3 [shape = 's32[1]{0}', space=sflag, size = 0x4, scoped, tag = 'scoped memory for tpu_custom_call.1']
    %6 = vsyncpa [#allocation3], 0
    // Predicated region
    $region2: #{tpu_custom_call.1} parent=1 // pred_check
      _
    $region3: #{tpu_custom_call.1} parent=1 // pred_check_branch
      %8 = sbr.rel (0) target = $region5
    $region4: #{tpu_custom_call.1} parent=1 // pred_region
      %10 = vsyncadd [#allocation3], 0
      %s11 = sshll.u32 %s0, 4
      %s12 = int_to_ptr.hbm [resolvable:$true] %s11
      %s13 = sshll.u32 [#allocation2], 4
      %s14 = int_to_ptr.vmem [resolvable:$true] %s13
      %19 = dma.hbm_to_vmem [thread:$0]  %s12, 1024, %s14, [#allocation3], 128, 128, 8
    $region5: #{tpu_custom_call.1} parent=1 // pred_fallthru
      _
    // Predicated region
    $region6: #{tpu_custom_call.1} parent=1 // pred_check
      _
    $region7: #{tpu_custom_call.1} parent=1 // pred_check_branch
      %21 = sbr.rel (0) target = $region9
    $region8: #{tpu_custom_call.1} parent=1 // pred_region
      %23 = dma.done [#allocation3], 1024
    $region9: #{tpu_custom_call.1} parent=1 // pred_fallthru
      _
    %v24 = vld [vmem:[#allocation2] sm:$0xff]
    %v25 = vld [vmem:[#allocation2 + $0x8] sm:$0xff]
    %v26 = vld [vmem:[#allocation2 + $0x10] sm:$0xff]
    %v27 = vld [vmem:[#allocation2 + $0x18] sm:$0xff]
    %v28 = vld [vmem:[#allocation2 + $0x20] sm:$0xff]
    %v29 = vld [vmem:[#allocation2 + $0x28] sm:$0xff]
    %v30 = vld [vmem:[#allocation2 + $0x30] sm:$0xff]
    %v31 = vld [vmem:[#allocation2 + $0x38] sm:$0xff]
    %v32 = vadd.f32 %v24, %v24
    %v33 = vadd.f32 %v25, %v25
    %v34 = vadd.f32 %v26, %v26
    %v35 = vadd.f32 %v27, %v27
    %v36 = vadd.f32 %v28, %v28
    %v37 = vadd.f32 %v29, %v29
    %v38 = vadd.f32 %v30, %v30
    %v39 = vadd.f32 %v31, %v31
    %40 = vxpose.xlu0.b32.start [1/16] %v32, 128
    %41 = vxpose.xlu0.b32.cont [2/16] %v33, 128
    %42 = vxpose.xlu0.b32.cont [3/16] %v34, 128
    %43 = vxpose.xlu0.b32.cont [4/16] %v35, 128
    %44 = vxpose.xlu0.b32.cont [5/16] %v36, 128
    %45 = vxpose.xlu0.b32.cont [6/16] %v37, 128
    %46 = vxpose.xlu0.b32.cont [7/16] %v38, 128
    %47 = vxpose.xlu0.b32.cont [8/16] %v39, 128
    %48 = vxpose.xlu0.b32.cont [9/16] 0.0, 128
    %49 = vxpose.xlu0.b32.cont [10/16] 0.0, 128
    %50 = vxpose.xlu0.b32.cont [11/16] 0.0, 128
    %51 = vxpose.xlu0.b32.cont [12/16] 0.0, 128
    %52 = vxpose.xlu0.b32.cont [13/16] 0.0, 128
    %53 = vxpose.xlu0.b32.cont [14/16] 0.0, 128
    %54 = vxpose.xlu0.b32.cont [15/16] 0.0, 128
    %55 = vxpose.xlu0.b32.end [16/16] 0.0, 128
    %v56 = vpop.trf.xlu0
    %v57 = vpop.trf.xlu0
    %v58 = vpop.trf.xlu0
    %v59 = vpop.trf.xlu0
    %v60 = vpop.trf.xlu0
    %v61 = vpop.trf.xlu0
    %v62 = vpop.trf.xlu0
    %v63 = vpop.trf.xlu0
    %v64 = vpop.trf.xlu0
    %v65 = vpop.trf.xlu0
    %v66 = vpop.trf.xlu0
    %v67 = vpop.trf.xlu0
    %v68 = vpop.trf.xlu0
    %v69 = vpop.trf.xlu0
    %v70 = vpop.trf.xlu0
    %v71 = vpop.trf.xlu0
    %vm72 = vcmask 523264
    %73 = vst.msk [vmem:[%s1] sm:$0xff] %vm72, %v56
    %74 = vst.msk [vmem:[%s1 + $0x8] sm:$0xff] %vm72, %v57
    %75 = vst.msk [vmem:[%s1 + $0x10] sm:$0xff] %vm72, %v58
    %76 = vst.msk [vmem:[%s1 + $0x18] sm:$0xff] %vm72, %v59
    %77 = vst.msk [vmem:[%s1 + $0x20] sm:$0xff] %vm72, %v60
    %78 = vst.msk [vmem:[%s1 + $0x28] sm:$0xff] %vm72, %v61
    %79 = vst.msk [vmem:[%s1 + $0x30] sm:$0xff] %vm72, %v62
    %80 = vst.msk [vmem:[%s1 + $0x38] sm:$0xff] %vm72, %v63
    %81 = vst.msk [vmem:[%s1 + $0x40] sm:$0xff] %vm72, %v64
    %82 = vst.msk [vmem:[%s1 + $0x48] sm:$0xff] %vm72, %v65
    %83 = vst.msk [vmem:[%s1 + $0x50] sm:$0xff] %vm72, %v66
    %84 = vst.msk [vmem:[%s1 + $0x58] sm:$0xff] %vm72, %v67
    %85 = vst.msk [vmem:[%s1 + $0x60] sm:$0xff] %vm72, %v68
    %86 = vst.msk [vmem:[%s1 + $0x68] sm:$0xff] %vm72, %v69
    %87 = vst.msk [vmem:[%s1 + $0x70] sm:$0xff] %vm72, %v70
    %88 = vst.msk [vmem:[%s1 + $0x78] sm:$0xff] %vm72, %v71
    // Predicated region
    $region10: #{tpu_custom_call.1} parent=1 // pred_check
      _
    $region11: #{tpu_custom_call.1} parent=1 // pred_check_branch
      %90 = sbr.rel (0) target = $region13
    $region12: #{tpu_custom_call.1} parent=1 // pred_region
      _
    $region13: #{tpu_custom_call.1} parent=1 // pred_fallthru
      _
    // Predicated region
    $region14: #{tpu_custom_call.1} parent=1 // pred_check
      _
    $region15: #{tpu_custom_call.1} parent=1 // pred_check_branch
      %92 = sbr.rel (0) target = $region17
    $region16: #{tpu_custom_call.1} parent=1 // pred_region
      _
    $region17: #{tpu_custom_call.1} parent=1 // pred_fallthru
      _
    %93 = vsyncpa [#allocation3], 1

</llo_original>
